<compile_context>
chip_gen: v6e
topology: v6e:2x2x1
jax: 0.10.0
libtpu: 0.0.40
codegen_flags: <defaults>
</compile_context>

<pallas_src>
import functools
import math

import jax
import jax.numpy as jnp
from jax.experimental import pallas as pl
from jax.experimental.pallas import tpu as pltpu


def _round_up(a, b):
    return -(-a // b) * b


def _plan_lane_tiling(LT, V, M, C, Cout, in_bytes, out_bytes, budget_bytes, min_tiles):
    """Pick (lane_tile, padded_LT).

    Guarantees: lane_tile == padded_LT (single whole-row tile), or lane_tile is a
    multiple of lcm(128, V) (lane-dense AND aligned to whole time steps) and
    padded_LT is a multiple of lane_tile.  The cost model charges double buffers
    for every pipelined operand plus the f32 in-kernel temporaries.
    """
    def cost(lt):
        tt = -(-lt // V)
        pipeline = 2 * (M * C * lt * in_bytes          # features block
                        + M * Cout * lt * out_bytes    # output block (f32)
                        + Cout * C * in_bytes          # fc_self.weight
                        + Cout * 4                     # bias (f32)
                        + lt * tt * in_bytes           # P   (sum over joints)
                        + tt * lt * 4)                 # P^T (broadcast, f32)
        temps = 2 * (C + Cout) * lt * 4                # f32 intermediates (hb, g, y, bias bcast)
        return pipeline + temps

    step = V * 128 // math.gcd(V, 128)                 # lcm(128, V)
    lt_whole = LT if LT >= 128 else _round_up(LT, 128)  # pad toy rows to lane-dense 128
    if cost(lt_whole) <= budget_bytes and (min_tiles <= 1 or LT <= step):
        return lt_whole, (lt_whole if LT < 128 else LT)

    # Tiled path: lane tile = k * lcm(128, V); largest k that fits the budget
    # (shrink-to-fit, floor of one step), capped so the row isn't over-covered
    # and, if requested, so there are >= 2 lane tiles (v7x core split).
    k_needed = max(1, -(-LT // step))
    k = 1
    while k < k_needed and cost((k + 1) * step) <= budget_bytes:
        k += 1
    if min_tiles > 1 and k_needed > 1:
        k = min(k, max(1, (LT - 1) // step))           # k*step < LT  =>  >= 2 tiles
    # Prefer a tile that divides LT exactly (no padding, no output re-copy).
    for kk in range(k, 0, -1):
        if LT % (kk * step) == 0:
            return kk * step, LT
    lt = k * step
    return lt, _round_up(LT, lt)


def _sage_gcn_kernel(f_ref, w_ref, b_ref, p_ref, pt_ref, o_ref, *, person_num, inv_deg):
    """One (batch, lane-tile) block of the SageGraph GCN-'mean' forward.

    f_ref : [1, M, C,   LT]  features (compute dtype), LT lanes = joint-aligned T*V tile
    w_ref : [Cout, C]        fc_self.weight (compute dtype)
    b_ref : [Cout, 1]        fc_self.bias (f32)
    p_ref : [LT, TT]         0/1 sum-over-joints pooling matrix (compute dtype)
    pt_ref: [TT, LT]         0/1 broadcast-over-joints matrix (f32)
    o_ref : [1, M, Cout, LT] output block (f32)
    """
    M = person_num
    Cout = o_ref.shape[2]
    lt = o_ref.shape[3]

    P = p_ref[...]
    Pt = pt_ref[...]
    # Hoisted once per grid step (not per person): f32 weight and bias broadcast.
    W = w_ref[...].astype(jnp.float32)                                   # [Cout, C]
    bb = jnp.broadcast_to(b_ref[...], (Cout, lt))                        # [Cout, LT]

    # Pass 1: per-person, per-time-step joint sums in input space.
    # bf16 x bf16 MXU dot with f32 accumulation; only the small [C, TT] results
    # stay live across the loops (feature slabs are re-read in pass 2).
    ps = [jnp.dot(f_ref[0, m], P, preferred_element_type=jnp.float32) for m in range(M)]
    total = ps[0]
    for m in range(1, M):
        total = total + ps[m]

    # Pass 2: GraphSAGE 'mean' over the fully-connected cross-person graph,
    # broadcast back over joints in input space, single fused projection.
    for m in range(M):
        hn = (total - ps[m]) * inv_deg                                    # [C, TT] f32
        hb = jnp.dot(hn, Pt, preferred_element_type=jnp.float32)          # [C, LT] f32
        g = f_ref[0, m].astype(jnp.float32) + hb                          # h_self + h_neigh
        y = jnp.dot(W, g, preferred_element_type=jnp.float32)             # [Cout, LT]
        o_ref[0, m] = jnp.maximum(y + bb, 0.0).astype(o_ref.dtype)        # fused bias + ReLU


def sage_graph_forward(x, person_num, joint_num, w_self, b_self,
                       *, compute_dtype=jnp.bfloat16, vmem_budget_bytes=None):
    """x: [B*M, C_in, T, V] -> y: [B*M, C_out, T, V] float32."""
    BM, C, T, V = x.shape
    M = int(person_num)
    assert V == joint_num and BM % M == 0 and M >= 1
    B = BM // M
    Cout, Cw = w_self.shape
    assert Cw == C
    LT = T * V

    # VMEM planning: query hardware capacity (v5e/v6e: 128 MiB, v7x: 64 MiB/TC).
    if vmem_budget_bytes is None:
        try:
            vmem_cap = int(pltpu.get_tpu_info().vmem_capacity_bytes)
        except Exception:
            vmem_cap = 64 * 1024 * 1024
        vmem_limit = min(vmem_cap, 100 * 1024 * 1024)
        vmem_budget_bytes = max(8 * 1024 * 1024, vmem_limit - 8 * 1024 * 1024)
    else:
        vmem_limit = min(int(vmem_budget_bytes) + 8 * 1024 * 1024, 128 * 1024 * 1024)

    in_bytes = jnp.dtype(compute_dtype).itemsize
    min_tiles = 2 if B == 1 else 1                      # keep both v7x TCs busy at batch 1
    lt, LT_pad = _plan_lane_tiling(LT, V, M, C, Cout, in_bytes, 4,
                                   vmem_budget_bytes, min_tiles)
    num_lt = LT_pad // lt
    tt = -(-lt // V)

    # Pure reshape (no HBM transpose): [B*M, C, T, V] -> [B, M, C, T*V]; zero-pad
    # lanes if needed (padding starts at a time-step boundary, so padded lanes
    # never influence real outputs) and cast to the compute dtype.
    f = x.reshape(B, M, C, LT)
    if LT_pad != LT:
        f = jnp.pad(f, ((0, 0), (0, 0), (0, 0), (0, LT_pad - LT)))
    f = f.astype(compute_dtype)
    w = w_self.astype(compute_dtype)
    b = b_self.reshape(Cout, 1).astype(jnp.float32)

    # 0/1 pooling matrices (exact in bf16): sum over joints within a time step,
    # and its transpose (kept f32 to match the f32 neighbour term in the kernel).
    lane_t = jnp.arange(lt, dtype=jnp.int32) // V
    P = (lane_t[:, None] == jnp.arange(tt, dtype=jnp.int32)[None, :]).astype(compute_dtype)
    Pt = P.T.astype(jnp.float32)

    inv_deg = 0.0 if M == 1 else 1.0 / float((M - 1) * V)
    kernel = functools.partial(_sage_gcn_kernel, person_num=M, inv_deg=inv_deg)

    out = pl.pallas_call(
        kernel,
        out_shape=jax.ShapeDtypeStruct((B, M, Cout, LT_pad), jnp.float32),
        grid=(B, num_lt),
        in_specs=[
            pl.BlockSpec((1, M, C, lt), lambda bi, li: (bi, 0, 0, li)),   # features
            pl.BlockSpec((Cout, C), lambda bi, li: (0, 0)),               # fc_self.weight
            pl.BlockSpec((Cout, 1), lambda bi, li: (0, 0)),               # fc_self.bias
            pl.BlockSpec((lt, tt), lambda bi, li: (0, 0)),                # P  (sum over V)
            pl.BlockSpec((tt, lt), lambda bi, li: (0, 0)),                # P^T (broadcast V)
        ],
        out_specs=pl.BlockSpec((1, M, Cout, lt), lambda bi, li: (bi, 0, 0, li)),
        compiler_params=pltpu.CompilerParams(
            dimension_semantics=("parallel", "parallel"),   # megacore-shardable grid
            vmem_limit_bytes=int(vmem_limit),
        ),
    )(f, w, b, P, Pt)

    if LT_pad != LT:
        out = out[..., :LT]
    # [B, M, Cout, T*V] -> [B*M, Cout, T, V] is a pure reshape; the in-kernel
    # ReLU already makes the module's trailing torch.relu a no-op.
    return out.reshape(B * M, Cout, T, V)


def reference_forward(x, person_num, joint_num, w_self, b_self,
                      compute_dtype=jnp.float32):
    """Pure-jnp reference mirroring the PyTorch forward (eval, 'mean', no sampling).

    `compute_dtype` quantizes the HBM inputs (features, weight) exactly like the
    kernel wrapper does; all arithmetic is f32.
    """
    BM, C, T, V = x.shape
    M = person_num
    B = BM // M
    f = x.reshape(B, M, C, T, V).astype(compute_dtype).astype(jnp.float32)
    w = w_self.astype(compute_dtype).astype(jnp.float32)
    b = b_self.astype(jnp.float32)
    person_sum = f.sum(axis=4, keepdims=True)                  # [B, M, C, T, 1]
    total = person_sum.sum(axis=1, keepdims=True)              # [B, 1, C, T, 1]
    deg = (M - 1) * joint_num
    h_neigh = (total - person_sum) * (0.0 if deg == 0 else 1.0 / float(deg))
    h = f + h_neigh                                            # h_self + h_neigh
    rst = jnp.einsum('bmctv,oc->bmotv', h, w,
                     precision=jax.lax.Precision.HIGHEST)
    rst = rst + b[None, None, :, None, None]
    rst = jnp.maximum(rst, 0.0)                                # GCN activation ReLU
    y = rst.reshape(B * M, -1, T, V)
    return jnp.maximum(y, 0.0)                                 # final torch.relu


if __name__ == "__main__":
    PERSON_NUM, JOINT_NUM = 2, 5
    B, T = 2, 8
    C_IN, C_OUT = 16, 32

    key = jax.random.PRNGKey(0)
    k1, k2, k3 = jax.random.split(key, 3)

    x = jax.random.normal(k1, (B * PERSON_NUM, C_IN, T, JOINT_NUM), dtype=jnp.float32)

    # fc_self parameters: xavier_uniform(gain=sqrt(2)) weight [C_out, C_in],
    # bias ~ U(-1/sqrt(C_in), 1/sqrt(C_in)) as in nn.Linear's default init.
    gain = 2.0 ** 0.5
    bound_w = gain * (6.0 / (C_IN + C_OUT)) ** 0.5
    w_self = jax.random.uniform(k2, (C_OUT, C_IN), jnp.float32, -bound_w, bound_w)
    bound_b = 1.0 / (C_IN ** 0.5)
    b_self = jax.random.uniform(k3, (C_OUT,), jnp.float32, -bound_b, bound_b)

    y = sage_graph_forward(x, PERSON_NUM, JOINT_NUM, w_self, b_self)
    y = jax.block_until_ready(y)

    # Reference evaluated on the same bf16-quantized HBM inputs; tolerance covers
    # MXU accumulation-order / f32-pass differences (measured well below this).
    y_ref = reference_forward(x, PERSON_NUM, JOINT_NUM, w_self, b_self,
                              compute_dtype=jnp.bfloat16)
    assert y.shape == (B * PERSON_NUM, C_OUT, T, JOINT_NUM), y.shape
    max_err = float(jnp.max(jnp.abs(y - y_ref)))
    assert jnp.allclose(y, y_ref, atol=2e-2, rtol=2e-2), max_err

    print("KERNEL_OK")
</pallas_src>

<mosaic_0001>
module attributes {stable_mosaic.version = 11 : i64} {
  func.func @_sage_gcn_kernel(%arg0: i32, %arg1: i32, %arg2: memref<1x2x16x128xbf16, #tpu.memory_space<vmem>>, %arg3: memref<32x16xbf16, #tpu.memory_space<vmem>>, %arg4: memref<32x1xf32, #tpu.memory_space<vmem>>, %arg5: memref<128x26xbf16, #tpu.memory_space<vmem>>, %arg6: memref<26x128xf32, #tpu.memory_space<vmem>>, %arg7: memref<1x2x32x128xf32, #tpu.memory_space<vmem>>) attributes {dimension_semantics = [#tpu.dimension_semantics<parallel>, #tpu.dimension_semantics<parallel>], iteration_bounds = array<i64: 2, 1>, scalar_prefetch = 0 : i64, scratch_operands = 0 : i64, tpu.core_type = #tpu.core_type<tc>, window_params = [{transform_indices = @transform_0, window_bounds = array<i64: 1, 2, 16, 128>}, {pipeline_mode = #tpu.pipeline_mode<synchronous>, transform_indices = @transform_1, window_bounds = array<i64: 32, 16>}, {pipeline_mode = #tpu.pipeline_mode<synchronous>, transform_indices = @transform_2, window_bounds = array<i64: 32, 1>}, {pipeline_mode = #tpu.pipeline_mode<synchronous>, transform_indices = @transform_3, window_bounds = array<i64: 128, 26>}, {pipeline_mode = #tpu.pipeline_mode<synchronous>, transform_indices = @transform_4, window_bounds = array<i64: 26, 128>}, {transform_indices = @transform_5, window_bounds = array<i64: 1, 2, 32, 128>}]} {
    %c0 = arith.constant 0 : index
    %c0_0 = arith.constant 0 : index
    %0 = vector.load %arg5[%c0, %c0_0] : memref<128x26xbf16, #tpu.memory_space<vmem>>, vector<128x26xbf16>
    %c0_1 = arith.constant 0 : index
    %c0_2 = arith.constant 0 : index
    %1 = vector.load %arg6[%c0_1, %c0_2] : memref<26x128xf32, #tpu.memory_space<vmem>>, vector<26x128xf32>
    %c0_3 = arith.constant 0 : index
    %c0_4 = arith.constant 0 : index
    %2 = vector.load %arg3[%c0_3, %c0_4] : memref<32x16xbf16, #tpu.memory_space<vmem>>, vector<32x16xbf16>
    %3 = arith.extf %2 : vector<32x16xbf16> to vector<32x16xf32>
    %c0_5 = arith.constant 0 : index
    %c0_6 = arith.constant 0 : index
    %4 = vector.load %arg4[%c0_5, %c0_6] : memref<32x1xf32, #tpu.memory_space<vmem>>, vector<32x1xf32>
    %5 = vector.shape_cast %4 : vector<32x1xf32> to vector<32x1xf32>
    %6 = vector.broadcast %5 : vector<32x1xf32> to vector<32x128xf32>
    %c0_7 = arith.constant 0 : index
    %c0_8 = arith.constant 0 : index
    %c0_9 = arith.constant 0 : index
    %c0_10 = arith.constant 0 : index
    %7 = vector.load %arg2[%c0_7, %c0_8, %c0_9, %c0_10] : memref<1x2x16x128xbf16, #tpu.memory_space<vmem>>, vector<1x1x16x128xbf16>
    %8 = vector.shape_cast %7 : vector<1x1x16x128xbf16> to vector<16x128xbf16>
    %cst = arith.constant dense<0.000000e+00> : vector<16x26xf32>
    %9 = tpu.matmul %8, %0, %cst {dimension_numbers = #tpu.dot_dimension_numbers<[1], [0], [0], [1], [0, 0, 1, 1], [], []>} : vector<16x128xbf16>, vector<128x26xbf16>, vector<16x26xf32> -> vector<16x26xf32>
    %c0_11 = arith.constant 0 : index
    %c1 = arith.constant 1 : index
    %c0_12 = arith.constant 0 : index
    %c0_13 = arith.constant 0 : index
    %10 = vector.load %arg2[%c0_11, %c1, %c0_12, %c0_13] : memref<1x2x16x128xbf16, #tpu.memory_space<vmem>>, vector<1x1x16x128xbf16>
    %11 = vector.shape_cast %10 : vector<1x1x16x128xbf16> to vector<16x128xbf16>
    %cst_14 = arith.constant dense<0.000000e+00> : vector<16x26xf32>
    %12 = tpu.matmul %11, %0, %cst_14 {dimension_numbers = #tpu.dot_dimension_numbers<[1], [0], [0], [1], [0, 0, 1, 1], [], []>} : vector<16x128xbf16>, vector<128x26xbf16>, vector<16x26xf32> -> vector<16x26xf32>
    %13 = arith.addf %9, %12 : vector<16x26xf32>
    %14 = arith.subf %13, %9 : vector<16x26xf32>
    %cst_15 = arith.constant 2.000000e-01 : f32
    %15 = vector.broadcast %cst_15 : f32 to vector<16x26xf32>
    %16 = arith.mulf %14, %15 : vector<16x26xf32>
    %cst_16 = arith.constant dense<0.000000e+00> : vector<16x128xf32>
    %17 = tpu.matmul %16, %1, %cst_16 {dimension_numbers = #tpu.dot_dimension_numbers<[1], [0], [0], [1], [0, 0, 1, 1], [], []>} : vector<16x26xf32>, vector<26x128xf32>, vector<16x128xf32> -> vector<16x128xf32>
    %c0_17 = arith.constant 0 : index
    %c0_18 = arith.constant 0 : index
    %c0_19 = arith.constant 0 : index
    %c0_20 = arith.constant 0 : index
    %18 = vector.load %arg2[%c0_17, %c0_18, %c0_19, %c0_20] : memref<1x2x16x128xbf16, #tpu.memory_space<vmem>>, vector<1x1x16x128xbf16>
    %19 = vector.shape_cast %18 : vector<1x1x16x128xbf16> to vector<16x128xbf16>
    %20 = arith.extf %19 : vector<16x128xbf16> to vector<16x128xf32>
    %21 = arith.addf %20, %17 : vector<16x128xf32>
    %cst_21 = arith.constant dense<0.000000e+00> : vector<32x128xf32>
    %22 = tpu.matmul %3, %21, %cst_21 {dimension_numbers = #tpu.dot_dimension_numbers<[1], [0], [0], [1], [0, 0, 1, 1], [], []>} : vector<32x16xf32>, vector<16x128xf32>, vector<32x128xf32> -> vector<32x128xf32>
    %23 = arith.addf %22, %6 : vector<32x128xf32>
    %cst_22 = arith.constant 0.000000e+00 : f32
    %24 = vector.broadcast %cst_22 : f32 to vector<32x128xf32>
    %25 = arith.maximumf %23, %24 : vector<32x128xf32>
    %c0_23 = arith.constant 0 : index
    %c0_24 = arith.constant 0 : index
    %c0_25 = arith.constant 0 : index
    %c0_26 = arith.constant 0 : index
    %26 = vector.load %arg7[%c0_23, %c0_24, %c0_25, %c0_26] : memref<1x2x32x128xf32, #tpu.memory_space<vmem>>, vector<1x1x32x128xf32>
    %27 = vector.shape_cast %26 : vector<1x1x32x128xf32> to vector<32x128xf32>
    %28 = vector.shape_cast %25 : vector<32x128xf32> to vector<1x1x32x128xf32>
    tpu.vector_store %arg7[%c0_23, %c0_24, %c0_25, %c0_26], %28 {strides = array<i32>} : memref<1x2x32x128xf32, #tpu.memory_space<vmem>>, vector<1x1x32x128xf32>,
    %29 = arith.subf %13, %12 : vector<16x26xf32>
    %cst_27 = arith.constant 2.000000e-01 : f32
    %30 = vector.broadcast %cst_27 : f32 to vector<16x26xf32>
    %31 = arith.mulf %29, %30 : vector<16x26xf32>
    %cst_28 = arith.constant dense<0.000000e+00> : vector<16x128xf32>
    %32 = tpu.matmul %31, %1, %cst_28 {dimension_numbers = #tpu.dot_dimension_numbers<[1], [0], [0], [1], [0, 0, 1, 1], [], []>} : vector<16x26xf32>, vector<26x128xf32>, vector<16x128xf32> -> vector<16x128xf32>
    %c0_29 = arith.constant 0 : index
    %c1_30 = arith.constant 1 : index
    %c0_31 = arith.constant 0 : index
    %c0_32 = arith.constant 0 : index
    %33 = vector.load %arg2[%c0_29, %c1_30, %c0_31, %c0_32] : memref<1x2x16x128xbf16, #tpu.memory_space<vmem>>, vector<1x1x16x128xbf16>
    %34 = vector.shape_cast %33 : vector<1x1x16x128xbf16> to vector<16x128xbf16>
    %35 = arith.extf %34 : vector<16x128xbf16> to vector<16x128xf32>
    %36 = arith.addf %35, %32 : vector<16x128xf32>
    %cst_33 = arith.constant dense<0.000000e+00> : vector<32x128xf32>
    %37 = tpu.matmul %3, %36, %cst_33 {dimension_numbers = #tpu.dot_dimension_numbers<[1], [0], [0], [1], [0, 0, 1, 1], [], []>} : vector<32x16xf32>, vector<16x128xf32>, vector<32x128xf32> -> vector<32x128xf32>
    %38 = arith.addf %37, %6 : vector<32x128xf32>
    %cst_34 = arith.constant 0.000000e+00 : f32
    %39 = vector.broadcast %cst_34 : f32 to vector<32x128xf32>
    %40 = arith.maximumf %38, %39 : vector<32x128xf32>
    %c0_35 = arith.constant 0 : index
    %c1_36 = arith.constant 1 : index
    %c0_37 = arith.constant 0 : index
    %c0_38 = arith.constant 0 : index
    %41 = vector.load %arg7[%c0_35, %c1_36, %c0_37, %c0_38] : memref<1x2x32x128xf32, #tpu.memory_space<vmem>>, vector<1x1x32x128xf32>
    %42 = vector.shape_cast %41 : vector<1x1x32x128xf32> to vector<32x128xf32>
    %43 = vector.shape_cast %40 : vector<32x128xf32> to vector<1x1x32x128xf32>
    tpu.vector_store %arg7[%c0_35, %c1_36, %c0_37, %c0_38], %43 {strides = array<i32>} : memref<1x2x32x128xf32, #tpu.memory_space<vmem>>, vector<1x1x32x128xf32>,
    return
  }
  func.func @transform_0(%arg0: i32, %arg1: i32) -> (i32, i32, i32, i32) {
    %c0_i32 = arith.constant 0 : i32
    %c0_i32_0 = arith.constant 0 : i32
    %c0_i32_1 = arith.constant 0 : i32
    return %arg0, %c0_i32, %c0_i32_0, %arg1 : i32, i32, i32, i32
  }
  func.func @transform_1(%arg0: i32, %arg1: i32) -> (i32, i32) {
    %c0_i32 = arith.constant 0 : i32
    %c0_i32_0 = arith.constant 0 : i32
    %c0_i32_1 = arith.constant 0 : i32
    return %c0_i32, %c0_i32_0 : i32, i32
  }
  func.func @transform_2(%arg0: i32, %arg1: i32) -> (i32, i32) {
    %c0_i32 = arith.constant 0 : i32
    %c0_i32_0 = arith.constant 0 : i32
    %c0_i32_1 = arith.constant 0 : i32
    return %c0_i32, %c0_i32_0 : i32, i32
  }
  func.func @transform_3(%arg0: i32, %arg1: i32) -> (i32, i32) {
    %c0_i32 = arith.constant 0 : i32
    %c0_i32_0 = arith.constant 0 : i32
    %c0_i32_1 = arith.constant 0 : i32
    return %c0_i32, %c0_i32_0 : i32, i32
  }
  func.func @transform_4(%arg0: i32, %arg1: i32) -> (i32, i32) {
    %c0_i32 = arith.constant 0 : i32
    %c0_i32_0 = arith.constant 0 : i32
    %c0_i32_1 = arith.constant 0 : i32
    return %c0_i32, %c0_i32_0 : i32, i32
  }
  func.func @transform_5(%arg0: i32, %arg1: i32) -> (i32, i32, i32, i32) {
    %c0_i32 = arith.constant 0 : i32
    %c0_i32_0 = arith.constant 0 : i32
    %c0_i32_1 = arith.constant 0 : i32
    return %arg0, %c0_i32, %c0_i32_0, %arg1 : i32, i32, i32, i32
  }
}

</mosaic_0001>

<llo_original>
// kernel: tpu_custom_call.1
$region0: #{tpu_custom_call.1}
  #allocation0 [shape = 'u32[]', space=smem, size = 0x4, offset = 0x4, fixed_abs, tag = 'smem constant byte address 0x4 - core index']
  #allocation1 [shape = 'u32[144,128]{1,0:T(1,128)}', space=vmem, size = 0x12000, scoped, tag = 'internal scratch']
  %s0 = inlined_call_operand.vmem [shape: bf16[2,2,16,128], index: 0, kind: input, shape index: {}]
  %s1 = inlined_call_operand.vmem [shape: bf16[32,16], index: 1, kind: input, shape index: {}]
  %s2 = inlined_call_operand.vmem [shape: f32[32,1], index: 2, kind: input, shape index: {}]
  %s3 = inlined_call_operand.vmem [shape: bf16[128,26], index: 3, kind: input, shape index: {}]
  %s4 = inlined_call_operand.vmem [shape: f32[26,128], index: 4, kind: input, shape index: {}]
  %s5 = inlined_call_operand.hbm [shape: f32[2,2,32,128], index: 5, kind: output, shape index: {}]
  %s6 = sld [smem:[#allocation0]]
  $region53: #{tpu_custom_call.1} parent=0
    _
  %s8 = ssub.s32 1, %s6
  %s9 = scalar_select 0, %s8, %s6
  $region1: #{tpu_custom_call.1} parent=0
    #allocation2 [shape = 'u8[65536]{0}', space=vmem, size = 0x10000, scoped, tag = 'output window, operand 0']
    #allocation3 [shape = 's32[2]{0}', space=sflag, size = 0x8, scoped, tag = 'scoped memory for tpu_custom_call.1']
    %10 = vsyncpa [#allocation3], 0
    %s11 = scalar_lea.sflag [#allocation3], 1
    %12 = vsyncpa %s11, 0
    loop: start=0, step=1, limit=4
    $region2: #{tpu_custom_call.1} parent=1 // loop_pre_header
      _
    $region3: #{tpu_custom_call.1} parent=1 // loop_header
      %s14 = sphi 0, %s18
      %p15 = scmp.ge.s32.totalorder %s14, 4
      %s21 = sphi 0, %s33
      %s22 = sphi 0, %s29
      %s23 = sphi 0, %s21
      %s24 = sphi 0, %s22
      %s25 = sphi 0, %s23
      %s26 = sphi 0, %s24
      %s38 = sphi 0, %s40
      %s41 = sphi 0, %s38
      %s42 = sphi 0, %s41
      %s58 = sphi 0, %s42
      %s62 = sphi 0, %s62
      %s64 = sphi 0, %s62
      %s65 = sphi 0, %s64
      %s79 = sphi 0, %s65
      %s83 = sphi 0, %s83
      %s85 = sphi 0, %s83
      %s86 = sphi 0, %s85
      %s100 = sphi 0, %s86
      %s104 = sphi 0, %s104
      %s106 = sphi 0, %s104
      %s107 = sphi 0, %s106
      %s121 = sphi 0, %s107
      %s125 = sphi 0, %s125
      %s127 = sphi 0, %s125
      %s128 = sphi 0, %s127
      %s142 = sphi 0, %s128
      %s150 = sphi 0, %s152
      %s153 = sphi 0, %s150
      %s154 = sphi 0, %s153
      %s170 = sphi 0, %s154
    $region4: #{tpu_custom_call.1} parent=1 // loop_header_branch
      %17 = sbr.rel (%p15) target = $region8
    $region5: #{tpu_custom_call.1} parent=1 // loop_body
      %s19 = ssub.s32 %s14, 1
      %s20 = ssub.s32 %s14, 2
      %s27 = sadd.s32 1, %s22
      %p28 = scmp.ge.s32.totalorder %s27, 1
      %s29 = scalar_select %p28, 0, %s27
      %s30 = sadd.s32 1, %s21
      %s31 = scalar_select %p28, %s30, %s21
      %p32 = scmp.ge.s32.totalorder %s31, 2
      %s33 = scalar_select %p32, 0, %s31
      %s34 = ssub.s32 %s21, %s33
      %s35 = ssub.s32 %s22, %s29
      %s36 = sor.u32 %s34, %s35
      %p37 = scmp.eq.s32.totalorder %s36, 0
      %s39 = sadd.s32 %s38, 1
      %s40 = scalar_select %p37, %s38, %s39
      %p43 = pneg %p37
      %p44 = scmp.eq.s32.totalorder %s14, 1
      %p45 = por %p43, %p44
      %p46 = scmp.ne.s32.totalorder %s38, %s41
      %p47 = scmp.eq.s32.totalorder %s14, 0
      %p48 = por %p46, %p47
      %p49 = scmp.ne.s32.totalorder %s38, %s41
      %p50 = scmp.eq.s32.totalorder %s19, 1
      %p51 = por %p49, %p50
      %p52 = scmp.ne.s32.totalorder %s41, %s42
      %p53 = scmp.eq.s32.totalorder %s19, 0
      %p54 = por %p52, %p53
      %p55 = scmp.ne.s32.totalorder %s41, %s42
      %p56 = scmp.eq.s32.totalorder %s20, 1
      %p57 = por %p55, %p56
      %p59 = scmp.ne.s32.totalorder %s42, %s58
      %p60 = scmp.eq.s32.totalorder %s20, 0
      %p61 = por %p59, %p60
      %s63 = sadd.s32 %s62, 1
      %p66 = scmp.eq.s32.totalorder %s14, 1
      %p67 = scmp.ne.s32.totalorder %s62, %s64
      %p68 = scmp.eq.s32.totalorder %s14, 0
      %p69 = por %p67, %p68
      %p70 = scmp.ne.s32.totalorder %s62, %s64
      %p71 = scmp.eq.s32.totalorder %s19, 1
      %p72 = por %p70, %p71
      %p73 = scmp.ne.s32.totalorder %s64, %s65
      %p74 = scmp.eq.s32.totalorder %s19, 0
      %p75 = por %p73, %p74
      %p76 = scmp.ne.s32.totalorder %s64, %s65
      %p77 = scmp.eq.s32.totalorder %s20, 1
      %p78 = por %p76, %p77
      %p80 = scmp.ne.s32.totalorder %s65, %s79
      %p81 = scmp.eq.s32.totalorder %s20, 0
      %p82 = por %p80, %p81
      %s84 = sadd.s32 %s83, 1
      %p87 = scmp.eq.s32.totalorder %s14, 1
      %p88 = scmp.ne.s32.totalorder %s83, %s85
      %p89 = scmp.eq.s32.totalorder %s14, 0
      %p90 = por %p88, %p89
      %p91 = scmp.ne.s32.totalorder %s83, %s85
      %p92 = scmp.eq.s32.totalorder %s19, 1
      %p93 = por %p91, %p92
      %p94 = scmp.ne.s32.totalorder %s85, %s86
      %p95 = scmp.eq.s32.totalorder %s19, 0
      %p96 = por %p94, %p95
      %p97 = scmp.ne.s32.totalorder %s85, %s86
      %p98 = scmp.eq.s32.totalorder %s20, 1
      %p99 = por %p97, %p98
      %p101 = scmp.ne.s32.totalorder %s86, %s100
      %p102 = scmp.eq.s32.totalorder %s20, 0
      %p103 = por %p101, %p102
      %s105 = sadd.s32 %s104, 1
      %p108 = scmp.eq.s32.totalorder %s14, 1
      %p109 = scmp.ne.s32.totalorder %s104, %s106
      %p110 = scmp.eq.s32.totalorder %s14, 0
      %p111 = por %p109, %p110
      %p112 = scmp.ne.s32.totalorder %s104, %s106
      %p113 = scmp.eq.s32.totalorder %s19, 1
      %p114 = por %p112, %p113
      %p115 = scmp.ne.s32.totalorder %s106, %s107
      %p116 = scmp.eq.s32.totalorder %s19, 0
      %p117 = por %p115, %p116
      %p118 = scmp.ne.s32.totalorder %s106, %s107
      %p119 = scmp.eq.s32.totalorder %s20, 1
      %p120 = por %p118, %p119
      %p122 = scmp.ne.s32.totalorder %s107, %s121
      %p123 = scmp.eq.s32.totalorder %s20, 0
      %p124 = por %p122, %p123
      %s126 = sadd.s32 %s125, 1
      %p129 = scmp.eq.s32.totalorder %s14, 1
      %p130 = scmp.ne.s32.totalorder %s125, %s127
      %p131 = scmp.eq.s32.totalorder %s14, 0
      %p132 = por %p130, %p131
      %p133 = scmp.ne.s32.totalorder %s125, %s127
      %p134 = scmp.eq.s32.totalorder %s19, 1
      %p135 = por %p133, %p134
      %p136 = scmp.ne.s32.totalorder %s127, %s128
      %p137 = scmp.eq.s32.totalorder %s19, 0
      %p138 = por %p136, %p137
      %p139 = scmp.ne.s32.totalorder %s127, %s128
      %p140 = scmp.eq.s32.totalorder %s20, 1
      %p141 = por %p139, %p140
      %p143 = scmp.ne.s32.totalorder %s128, %s142
      %p144 = scmp.eq.s32.totalorder %s20, 0
      %p145 = por %p143, %p144
      %s146 = ssub.s32 %s21, %s33
      %s147 = ssub.s32 %s22, %s29
      %s148 = sor.u32 %s146, %s147
      %p149 = scmp.eq.s32.totalorder %s148, 0
      %s151 = sadd.s32 %s150, 1
      %s152 = scalar_select %p149, %s150, %s151
      %p155 = pneg %p149
      %p156 = scmp.eq.s32.totalorder %s14, 1
      %p157 = por %p155, %p156
      %p158 = scmp.ne.s32.totalorder %s150, %s153
      %p159 = scmp.eq.s32.totalorder %s14, 0
      %p160 = por %p158, %p159
      %p161 = scmp.ne.s32.totalorder %s150, %s153
      %p162 = scmp.eq.s32.totalorder %s19, 1
      %p163 = por %p161, %p162
      %p164 = scmp.ne.s32.totalorder %s153, %s154
      %p165 = scmp.eq.s32.totalorder %s19, 0
      %p166 = por %p164, %p165
      %p167 = scmp.ne.s32.totalorder %s153, %s154
      %p168 = scmp.eq.s32.totalorder %s20, 1
      %p169 = por %p167, %p168
      %p171 = scmp.ne.s32.totalorder %s154, %s170
      %p172 = scmp.eq.s32.totalorder %s20, 0
      %p173 = por %p171, %p172
      %p174 = scmp.le.s32.totalorder 1, %s14
      %p175 = scmp.lt.s32.totalorder %s14, 3
      %p176 = pnand %p174, %p175
      %p177 = pneg %p176
      // Predicated region
      $region9: #{tpu_custom_call.1} parent=5 // pred_check
        _
      $region10: #{tpu_custom_call.1} parent=5 // pred_check_branch
        %179 = sbr.rel (%p176) target = $region12
      $region11: #{tpu_custom_call.1} parent=5 // pred_region
        %s180 = ssub.s32 %s14, 1
        // Predicated region
        $region13: #{tpu_custom_call.1} parent=11 // pred_check
          %p181 = pneg %p75
        $region14: #{tpu_custom_call.1} parent=11 // pred_check_branch
          %183 = sbr.rel (%p181) target = $region16
        $region15: #{tpu_custom_call.1} parent=11 // pred_region
          _
        $region16: #{tpu_custom_call.1} parent=11 // pred_fallthru
          _
        // Predicated region
        $region17: #{tpu_custom_call.1} parent=11 // pred_check
          %p184 = pneg %p96
        $region18: #{tpu_custom_call.1} parent=11 // pred_check_branch
          %186 = sbr.rel (%p184) target = $region20
        $region19: #{tpu_custom_call.1} parent=11 // pred_region
          _
        $region20: #{tpu_custom_call.1} parent=11 // pred_fallthru
          _
        // Predicated region
        $region21: #{tpu_custom_call.1} parent=11 // pred_check
          %p187 = pneg %p117
        $region22: #{tpu_custom_call.1} parent=11 // pred_check_branch
          %189 = sbr.rel (%p187) target = $region24
        $region23: #{tpu_custom_call.1} parent=11 // pred_region
          _
        $region24: #{tpu_custom_call.1} parent=11 // pred_fallthru
          _
        // Predicated region
        $region25: #{tpu_custom_call.1} parent=11 // pred_check
          %p190 = pneg %p138
        $region26: #{tpu_custom_call.1} parent=11 // pred_check_branch
          %192 = sbr.rel (%p190) target = $region28
        $region27: #{tpu_custom_call.1} parent=11 // pred_region
          _
        $region28: #{tpu_custom_call.1} parent=11 // pred_fallthru
          _
      $region12: #{tpu_custom_call.1} parent=5 // pred_fallthru
        _
      %p193 = scmp.lt.s32.totalorder %s14, 2
      // Predicated region
      $region29: #{tpu_custom_call.1} parent=5 // pred_check
        %p194 = pneg %p193
      $region30: #{tpu_custom_call.1} parent=5 // pred_check_branch
        %196 = sbr.rel (%p194) target = $region32
      $region31: #{tpu_custom_call.1} parent=5 // pred_region
        // Predicated region
        $region33: #{tpu_custom_call.1} parent=31 // pred_check
          %p197 = pneg %p48
        $region34: #{tpu_custom_call.1} parent=31 // pred_check_branch
          %199 = sbr.rel (%p197) target = $region36
        $region35: #{tpu_custom_call.1} parent=31 // pred_region
          %p200 = scmp.lt.s32.totalorder %s21, 1
          %s201 = scalar_select %p200, %s21, 1
          %p202 = scmp.lt.s32.totalorder %s22, 0
          %s203 = scalar_select %p202, %s22, 0
          %s204 = smul.addr %s201, 4
          %s205 = sadd.s32 %s203, %s204
          %s206 = smul.addr %s205, 4
          %s207 = scalar_lea.vmem %s0, %s206
        $region36: #{tpu_custom_call.1} parent=31 // pred_fallthru
          _
      $region32: #{tpu_custom_call.1} parent=5 // pred_fallthru
        _
      %p208 = scmp.le.s32.totalorder 1, %s14
      %p209 = scmp.lt.s32.totalorder %s14, 3
      %p210 = pnand %p208, %p209
      %p211 = pneg %p210
      // Predicated region
      $region37: #{tpu_custom_call.1} parent=5 // pred_check
        _
      $region38: #{tpu_custom_call.1} parent=5 // pred_check_branch
        %213 = sbr.rel (%p210) target = $region40
      $region39: #{tpu_custom_call.1} parent=5 // pred_region
        %s214 = ssub.s32 %s14, 1
        %p215 = scmp.lt.s32.totalorder %s23, 1
        %s216 = scalar_select %p215, %s23, 1
        %p217 = scmp.lt.s32.totalorder %s24, 0
        %s218 = scalar_select %p217, %s24, 0
        %s219 = smul.addr %s216, 4
        %s220 = sadd.s32 %s218, %s219
        %s221 = smul.addr %s220, 4
        %s222 = scalar_lea.vmem %s0, %s221
        %p223 = pneg %p54
        %p224 = pneg %p51
        %p225 = pneg %p75
        %p226 = pneg %p72
        %p227 = pneg %p96
        %p228 = pneg %p93
        %p229 = pneg %p117
        %p230 = pneg %p114
        %p231 = pneg %p138
        %p232 = pneg %p135
        %p233 = pneg %p166
        %p234 = pneg %p163
        %s235 = sand.u32 %s153, 1
        %s236 = scalar_lea.sflag [#allocation3], %s235
        %s237 = sand.u32 %s153, 1
        %s238 = smul.addr %s237, 64
        %s239 = scalar_lea.vmem [#allocation2], %s238
        %p240 = scmp.lt.s32.totalorder %s23, 1
        %s241 = scalar_select %p240, %s23, 1
        %p242 = scmp.lt.s32.totalorder %s24, 0
        %s243 = scalar_select %p242, %s24, 0
        %s244 = smul.addr %s241, 4
        %s245 = sadd.s32 %s243, %s244
        %s246 = smul.addr %s245, 4
        %s247 = scalar_lea.vmem %s0, %s246
        %v249 = vld [vmem:[%s3] sm:$0xf]
        %v250 = vld [vmem:[%s3 + $0x4] sm:$0xf]
        %v251 = vld [vmem:[%s3 + $0x8] sm:$0xf]
        %v252 = vld [vmem:[%s3 + $0xc] sm:$0xf]
        %v253 = vld [vmem:[%s3 + $0x10] sm:$0xf]
        %v254 = vld [vmem:[%s3 + $0x14] sm:$0xf]
        %v255 = vld [vmem:[%s3 + $0x18] sm:$0xf]
        %v256 = vld [vmem:[%s3 + $0x1c] sm:$0xf]
        %v257 = vld [vmem:[%s3 + $0x20] sm:$0xf]
        %v258 = vld [vmem:[%s3 + $0x24] sm:$0xf]
        %v259 = vld [vmem:[%s3 + $0x28] sm:$0xf]
        %v260 = vld [vmem:[%s3 + $0x2c] sm:$0xf]
        %v261 = vld [vmem:[%s3 + $0x30] sm:$0xf]
        %v262 = vld [vmem:[%s3 + $0x34] sm:$0xf]
        %v263 = vld [vmem:[%s3 + $0x38] sm:$0xf]
        %v264 = vld [vmem:[%s3 + $0x3c] sm:$0xf]
        %v265 = vld [vmem:[%s4] sm:$0xff]
        %v266 = vld [vmem:[%s4 + $0x8] sm:$0xff]
        %v267 = vld [vmem:[%s4 + $0x10] sm:$0xff]
        %v268 = vld [vmem:[%s4 + $0x18] sm:$0x3]
        %v269 = vld [vmem:[%s1] sm:$0xf]
        %v270 = vld [vmem:[%s1 + $0x4] sm:$0xf]
        %v271 = vld [vmem:[%s1 + $0x8] sm:$0xf]
        %v272 = vld [vmem:[%s1 + $0xc] sm:$0xf]
        %v273 = vunpack.c.l.bf16 %v269
        %v274 = vunpack.c.l.bf16 %v270
        %v275 = vunpack.c.l.bf16 %v271
        %v276 = vunpack.c.l.bf16 %v272
        %v277 = vld [vmem:[%s2] sm:$0xff]
        %v278 = vld [vmem:[%s2 + $0x8] sm:$0xff]
        %v279 = vld [vmem:[%s2 + $0x10] sm:$0xff]
        %v280 = vld [vmem:[%s2 + $0x18] sm:$0xff]
        %282 = vset.pattern.permute.xlu0 0
        %283 = vperm.xlu0 %282, %v277
        %v284 = vpop.permute.xlu0 %283
        %287 = vset.pattern.permute.xlu0 0
        %288 = vperm.xlu0 %287, %v278
        %v289 = vpop.permute.xlu0 %288
        %292 = vset.pattern.permute.xlu0 0
        %293 = vperm.xlu0 %292, %v279
        %v294 = vpop.permute.xlu0 %293
        %297 = vset.pattern.permute.xlu0 0
        %298 = vperm.xlu0 %297, %v280
        %v299 = vpop.permute.xlu0 %298
        %v301 = vld [vmem:[%s247] sm:$0xf]
        %v302 = vld [vmem:[%s247 + $0x4] sm:$0xf]
        %v305 = vunpack.c.l.b16 %v301
        %v306 = vunpack.c.l.b16 %v302
        %v307 = vpack.c.b16 %v306, %v305
        %v325 = vunpack.c.l.b16 %v249
        %v326 = vunpack.c.l.b16 %v250
        %v327 = vunpack.c.l.b16 %v251
        %v328 = vunpack.c.l.b16 %v252
        %v329 = vunpack.c.l.b16 %v253
        %v330 = vunpack.c.l.b16 %v254
        %v331 = vunpack.c.l.b16 %v255
        %v332 = vunpack.c.l.b16 %v256
        %v333 = vunpack.c.l.b16 %v257
        %v334 = vunpack.c.l.b16 %v258
        %v335 = vunpack.c.l.b16 %v259
        %v336 = vunpack.c.l.b16 %v260
        %v337 = vunpack.c.l.b16 %v261
        %v338 = vunpack.c.l.b16 %v262
        %v339 = vunpack.c.l.b16 %v263
        %v340 = vunpack.c.l.b16 %v264
        %v341 = vpack.c.b16 %v326, %v325
        %v342 = vpack.c.b16 %v328, %v327
        %v343 = vpack.c.b16 %v330, %v329
        %v344 = vpack.c.b16 %v332, %v331
        %v345 = vpack.c.b16 %v334, %v333
        %v346 = vpack.c.b16 %v336, %v335
        %v347 = vpack.c.b16 %v338, %v337
        %v348 = vpack.c.b16 %v340, %v339
        %357 = vmatprep.subr.bf16.mxu0 0
        %358 = vmatpush1.bf16.msra.mxu0 %v348
        %359 = vmatprep.subr.bf16.mxu0 0
        %360 = vmatpush1.bf16.msra.mxu0 %v347
        %361 = vmatprep.subr.bf16.mxu0 0
        %362 = vmatpush1.bf16.msra.mxu0 %v346
        %363 = vmatprep.subr.bf16.mxu0 0
        %364 = vmatpush1.bf16.msra.mxu0 %v345
        %365 = vmatprep.subr.bf16.mxu0 0
        %366 = vmatpush1.bf16.msra.mxu0 %v344
        %367 = vmatprep.subr.bf16.mxu0 0
        %368 = vmatpush1.bf16.msra.mxu0 %v343
        %369 = vmatprep.subr.bf16.mxu0 0
        %370 = vmatpush1.bf16.msra.mxu0 %v342
        %371 = vmatprep.subr.bf16.mxu0 0
        %372 = vmatpush1.bf16.msra.mxu0 %v341
        %373 = vmatprep.subr.bf16.mxu0 0
        %374 = vmatpush2.bf16.msra.mxu0 0
        %375 = vmatprep.subr.bf16.mxu0 0
        %376 = vmatpush2.bf16.msra.mxu0 0
        %377 = vmatprep.subr.bf16.mxu0 0
        %378 = vmatpush2.bf16.msra.mxu0 0
        %379 = vmatprep.subr.bf16.mxu0 0
        %380 = vmatpush2.bf16.msra.mxu0 0
        %381 = vmatprep.subr.bf16.mxu0 0
        %382 = vmatpush2.bf16.msra.mxu0 0
        %383 = vmatprep.subr.bf16.mxu0 0
        %384 = vmatpush2.bf16.msra.mxu0 0
        %385 = vmatprep.subr.bf16.mxu0 0
        %386 = vmatpush2.bf16.msra.mxu0 0
        %387 = vmatprep.subr.bf16.mxu0 0
        %388 = vmatpush2.bf16.msra.mxu0 0
        %389 = vmatprep.mubr.bf16.mxu0 0
        %390 = vmatmul.mubr.bf16.gmra.mxu0 %v307
        %v391 = vpop.f32.mrf.mxu0
        %v392 = vadd.f32 0.0, %v391
        %v393 = vpop.f32.mrf.mxu0
        %v394 = vpop.f32.mrf.mxu0
        %v395 = vadd.f32 0.0, %v394
        %v396 = vpop.f32.mrf.mxu0
        %397 = vdwg.mxu0
        %s398 = scalar_lea.vmem %s247, 8
        %v399 = vld [vmem:[%s398] sm:$0xf]
        %v400 = vld [vmem:[%s398 + $0x4] sm:$0xf]
        %v403 = vunpack.c.l.b16 %v399
        %v404 = vunpack.c.l.b16 %v400
        %v405 = vpack.c.b16 %v404, %v403
        %407 = vmatprep.subr.bf16.mxu0 0
        %408 = vmatpush1.bf16.msra.mxu0 %v348
        %409 = vmatprep.subr.bf16.mxu0 0
        %410 = vmatpush1.bf16.msra.mxu0 %v347
        %411 = vmatprep.subr.bf16.mxu0 0
        %412 = vmatpush1.bf16.msra.mxu0 %v346
        %413 = vmatprep.subr.bf16.mxu0 0
        %414 = vmatpush1.bf16.msra.mxu0 %v345
        %415 = vmatprep.subr.bf16.mxu0 0
        %416 = vmatpush1.bf16.msra.mxu0 %v344
        %417 = vmatprep.subr.bf16.mxu0 0
        %418 = vmatpush1.bf16.msra.mxu0 %v343
        %419 = vmatprep.subr.bf16.mxu0 0
        %420 = vmatpush1.bf16.msra.mxu0 %v342
        %421 = vmatprep.subr.bf16.mxu0 0
        %422 = vmatpush1.bf16.msra.mxu0 %v341
        %423 = vmatprep.subr.bf16.mxu0 0
        %424 = vmatpush2.bf16.msra.mxu0 0
        %425 = vmatprep.subr.bf16.mxu0 0
        %426 = vmatpush2.bf16.msra.mxu0 0
        %427 = vmatprep.subr.bf16.mxu0 0
        %428 = vmatpush2.bf16.msra.mxu0 0
        %429 = vmatprep.subr.bf16.mxu0 0
        %430 = vmatpush2.bf16.msra.mxu0 0
        %431 = vmatprep.subr.bf16.mxu0 0
        %432 = vmatpush2.bf16.msra.mxu0 0
        %433 = vmatprep.subr.bf16.mxu0 0
        %434 = vmatpush2.bf16.msra.mxu0 0
        %435 = vmatprep.subr.bf16.mxu0 0
        %436 = vmatpush2.bf16.msra.mxu0 0
        %437 = vmatprep.subr.bf16.mxu0 0
        %438 = vmatpush2.bf16.msra.mxu0 0
        %439 = vmatprep.mubr.bf16.mxu0 0
        %440 = vmatmul.mubr.bf16.gmra.mxu0 %v405
        %v441 = vpop.f32.mrf.mxu0
        %v442 = vadd.f32 0.0, %v441
        %v443 = vpop.f32.mrf.mxu0
        %v444 = vpop.f32.mrf.mxu0
        %v445 = vadd.f32 0.0, %v444
        %v446 = vpop.f32.mrf.mxu0
        %447 = vdwg.mxu0
        %v448 = vadd.f32 %v392, %v442
        %v449 = vadd.f32 %v395, %v445
        %v450 = vsub.f32 %v448, %v392
        %v451 = vsub.f32 %v449, %v395
        %v452 = vmul.f32 %v450, 0.2
        %v453 = vmul.f32 %v451, 0.2
        %vm454 = vcmask 211968
        %v456 = vsel %vm454, %v452, 0
        %v459 = vsel %vm454, %v453, 0
        %vm461 = vcmask 1041408
        %v463 = vsel %vm461, %v268, 0
        %465 = vmatprep.subr.mxu0 0.0
        %466 = vmatpush1.msra.mxu0 0.0
        %467 = vmatprep.subr.mxu0 0.0
        %468 = vmatpush1.msra.mxu0 0.0
        %469 = vmatprep.subr.mxu0 0.0
        %470 = vmatpush1.msra.mxu0 0.0
        %471 = vmatprep.subr.mxu0 0.0
        %472 = vmatpush1.msra.mxu0 0.0
        %473 = vmatprep.subr.mxu0 0.0
        %474 = vmatpush1.msra.mxu0 0.0
        %475 = vmatprep.subr.mxu0 0.0
        %476 = vmatpush1.msra.mxu0 0.0
        %477 = vmatprep.subr.mxu0 0.0
        %478 = vmatpush1.msra.mxu0 0.0
        %479 = vmatprep.subr.mxu0 0.0
        %480 = vmatpush1.msra.mxu0 0.0
        %481 = vmatprep.subr.mxu0 0.0
        %482 = vmatpush1.msra.mxu0 0.0
        %483 = vmatprep.subr.mxu0 0.0
        %484 = vmatpush1.msra.mxu0 0.0
        %485 = vmatprep.subr.mxu0 0.0
        %486 = vmatpush1.msra.mxu0 0.0
        %487 = vmatprep.subr.mxu0 0.0
        %488 = vmatpush1.msra.mxu0 0.0
        %489 = vmatprep.subr.mxu0 0.0
        %490 = vmatpush1.msra.mxu0 %v463
        %491 = vmatprep.subr.mxu0 0.0
        %492 = vmatpush1.msra.mxu0 %v267
        %493 = vmatprep.subr.mxu0 0.0
        %494 = vmatpush1.msra.mxu0 %v266
        %495 = vmatprep.subr.mxu0 0.0
        %496 = vmatpush1.msra.mxu0 %v265
        %497 = vmatprep.subr.mxu0 0.0
        %498 = vmatpush2.msra.mxu0 0.0
        %499 = vmatprep.subr.mxu0 0.0
        %500 = vmatpush2.msra.mxu0 0.0
        %501 = vmatprep.subr.mxu0 0.0
        %502 = vmatpush2.msra.mxu0 0.0
        %503 = vmatprep.subr.mxu0 0.0
        %504 = vmatpush2.msra.mxu0 0.0
        %505 = vmatprep.subr.mxu0 0.0
        %506 = vmatpush2.msra.mxu0 0.0
        %507 = vmatprep.subr.mxu0 0.0
        %508 = vmatpush2.msra.mxu0 0.0
        %509 = vmatprep.subr.mxu0 0.0
        %510 = vmatpush2.msra.mxu0 0.0
        %511 = vmatprep.subr.mxu0 0.0
        %512 = vmatpush2.msra.mxu0 0.0
        %513 = vmatprep.subr.mxu0 0.0
        %514 = vmatpush2.msra.mxu0 0.0
        %515 = vmatprep.subr.mxu0 0.0
        %516 = vmatpush2.msra.mxu0 0.0
        %517 = vmatprep.subr.mxu0 0.0
        %518 = vmatpush2.msra.mxu0 0.0
        %519 = vmatprep.subr.mxu0 0.0
        %520 = vmatpush2.msra.mxu0 0.0
        %521 = vmatprep.subr.mxu0 0.0
        %522 = vmatpush2.msra.mxu0 0.0
        %523 = vmatprep.subr.mxu0 0.0
        %524 = vmatpush2.msra.mxu0 0.0
        %525 = vmatprep.subr.mxu0 0.0
        %526 = vmatpush2.msra.mxu0 0.0
        %527 = vmatprep.subr.mxu0 0.0
        %528 = vmatpush2.msra.mxu0 0.0
        %529 = vmatprep.mubr.f32.mxu0 0.0
        %530 = vmatmul.mubr.f32.gmra.mxu0 %v456
        %v531 = vpop.f32.mrf.mxu0
        %v532 = vadd.f32 0.0, %v531
        %v533 = vpop.f32.mrf.mxu0
        %534 = vmatprep.mubr.f32.mxu0 0.0
        %535 = vmatmul.mubr.f32.gmra.mxu0 %v459
        %v536 = vpop.f32.mrf.mxu0
        %v537 = vadd.f32 0.0, %v536
        %v538 = vpop.f32.mrf.mxu0
        %539 = vdwg.mxu0
        %v540 = vunpack.c.l.bf16 %v301
        %v541 = vunpack.c.l.bf16 %v302
        %v542 = vadd.f32 %v540, %v532
        %v543 = vadd.f32 %v541, %v537
        %vm544 = vcmask 130048
        %v546 = vsel %vm544, %v273, 0
        %v549 = vsel %vm544, %v274, 0
        %v552 = vsel %vm544, %v275, 0
        %v555 = vsel %vm544, %v276, 0
        %557 = vmatprep.subr.mxu0 0.0
        %558 = vmatpush1.msra.mxu0 0.0
        %559 = vmatprep.subr.mxu0 0.0
        %560 = vmatpush1.msra.mxu0 0.0
        %561 = vmatprep.subr.mxu0 0.0
        %562 = vmatpush1.msra.mxu0 0.0
        %563 = vmatprep.subr.mxu0 0.0
        %564 = vmatpush1.msra.mxu0 0.0
        %565 = vmatprep.subr.mxu0 0.0
        %566 = vmatpush1.msra.mxu0 0.0
        %567 = vmatprep.subr.mxu0 0.0
        %568 = vmatpush1.msra.mxu0 0.0
        %569 = vmatprep.subr.mxu0 0.0
        %570 = vmatpush1.msra.mxu0 0.0
        %571 = vmatprep.subr.mxu0 0.0
        %572 = vmatpush1.msra.mxu0 0.0
        %573 = vmatprep.subr.mxu0 0.0
        %574 = vmatpush1.msra.mxu0 0.0
        %575 = vmatprep.subr.mxu0 0.0
        %576 = vmatpush1.msra.mxu0 0.0
        %577 = vmatprep.subr.mxu0 0.0
        %578 = vmatpush1.msra.mxu0 0.0
        %579 = vmatprep.subr.mxu0 0.0
        %580 = vmatpush1.msra.mxu0 0.0
        %581 = vmatprep.subr.mxu0 0.0
        %582 = vmatpush1.msra.mxu0 0.0
        %583 = vmatprep.subr.mxu0 0.0
        %584 = vmatpush1.msra.mxu0 0.0
        %585 = vmatprep.subr.mxu0 0.0
        %586 = vmatpush1.msra.mxu0 %v543
        %587 = vmatprep.subr.mxu0 0.0
        %588 = vmatpush1.msra.mxu0 %v542
        %589 = vmatprep.subr.mxu0 0.0
        %590 = vmatpush2.msra.mxu0 0.0
        %591 = vmatprep.subr.mxu0 0.0
        %592 = vmatpush2.msra.mxu0 0.0
        %593 = vmatprep.subr.mxu0 0.0
        %594 = vmatpush2.msra.mxu0 0.0
        %595 = vmatprep.subr.mxu0 0.0
        %596 = vmatpush2.msra.mxu0 0.0
        %597 = vmatprep.subr.mxu0 0.0
        %598 = vmatpush2.msra.mxu0 0.0
        %599 = vmatprep.subr.mxu0 0.0
        %600 = vmatpush2.msra.mxu0 0.0
        %601 = vmatprep.subr.mxu0 0.0
        %602 = vmatpush2.msra.mxu0 0.0
        %603 = vmatprep.subr.mxu0 0.0
        %604 = vmatpush2.msra.mxu0 0.0
        %605 = vmatprep.subr.mxu0 0.0
        %606 = vmatpush2.msra.mxu0 0.0
        %607 = vmatprep.subr.mxu0 0.0
        %608 = vmatpush2.msra.mxu0 0.0
        %609 = vmatprep.subr.mxu0 0.0
        %610 = vmatpush2.msra.mxu0 0.0
        %611 = vmatprep.subr.mxu0 0.0
        %612 = vmatpush2.msra.mxu0 0.0
        %613 = vmatprep.subr.mxu0 0.0
        %614 = vmatpush2.msra.mxu0 0.0
        %615 = vmatprep.subr.mxu0 0.0
        %616 = vmatpush2.msra.mxu0 0.0
        %617 = vmatprep.subr.mxu0 0.0
        %618 = vmatpush2.msra.mxu0 0.0
        %619 = vmatprep.subr.mxu0 0.0
        %620 = vmatpush2.msra.mxu0 0.0
        %621 = vmatprep.mubr.f32.mxu0 0.0
        %622 = vmatmul.mubr.f32.gmra.mxu0 %v546
        %v623 = vpop.f32.mrf.mxu0
        %v624 = vadd.f32 %v284, %v623
        %v625 = vpop.f32.mrf.mxu0
        %626 = vmatprep.mubr.f32.mxu0 0.0
        %627 = vmatmul.mubr.f32.gmra.mxu0 %v549
        %v628 = vpop.f32.mrf.mxu0
        %v629 = vadd.f32 %v289, %v628
        %v630 = vpop.f32.mrf.mxu0
        %631 = vmatprep.mubr.f32.mxu0 0.0
        %632 = vmatmul.mubr.f32.gmra.mxu0 %v552
        %v633 = vpop.f32.mrf.mxu0
        %v634 = vadd.f32 %v294, %v633
        %v635 = vpop.f32.mrf.mxu0
        %636 = vmatprep.mubr.f32.mxu0 0.0
        %637 = vmatmul.mubr.f32.gmra.mxu0 %v555
        %v638 = vpop.f32.mrf.mxu0
        %v639 = vadd.f32 %v299, %v638
        %v640 = vpop.f32.mrf.mxu0
        %641 = vdwg.mxu0
        %v642 = vmax.f32 %v624, 0.0
        %v643 = vmax.f32 %v629, 0.0
        %v644 = vmax.f32 %v634, 0.0
        %v645 = vmax.f32 %v639, 0.0
        %646 = vst [vmem:[%s239] sm:$0xff] %v642
        %647 = vst [vmem:[%s239 + $0x8] sm:$0xff] %v643
        %648 = vst [vmem:[%s239 + $0x10] sm:$0xff] %v644
        %649 = vst [vmem:[%s239 + $0x18] sm:$0xff] %v645
        %v650 = vsub.f32 %v448, %v442
        %v651 = vsub.f32 %v449, %v445
        %v652 = vmul.f32 %v650, 0.2
        %v653 = vmul.f32 %v651, 0.2
        %v655 = vsel %vm454, %v652, 0
        %v658 = vsel %vm454, %v653, 0
        %660 = vmatprep.subr.mxu0 0.0
        %661 = vmatpush1.msra.mxu0 0.0
        %662 = vmatprep.subr.mxu0 0.0
        %663 = vmatpush1.msra.mxu0 0.0
        %664 = vmatprep.subr.mxu0 0.0
        %665 = vmatpush1.msra.mxu0 0.0
        %666 = vmatprep.subr.mxu0 0.0
        %667 = vmatpush1.msra.mxu0 0.0
        %668 = vmatprep.subr.mxu0 0.0
        %669 = vmatpush1.msra.mxu0 0.0
        %670 = vmatprep.subr.mxu0 0.0
        %671 = vmatpush1.msra.mxu0 0.0
        %672 = vmatprep.subr.mxu0 0.0
        %673 = vmatpush1.msra.mxu0 0.0
        %674 = vmatprep.subr.mxu0 0.0
        %675 = vmatpush1.msra.mxu0 0.0
        %676 = vmatprep.subr.mxu0 0.0
        %677 = vmatpush1.msra.mxu0 0.0
        %678 = vmatprep.subr.mxu0 0.0
        %679 = vmatpush1.msra.mxu0 0.0
        %680 = vmatprep.subr.mxu0 0.0
        %681 = vmatpush1.msra.mxu0 0.0
        %682 = vmatprep.subr.mxu0 0.0
        %683 = vmatpush1.msra.mxu0 0.0
        %684 = vmatprep.subr.mxu0 0.0
        %685 = vmatpush1.msra.mxu0 %v463
        %686 = vmatprep.subr.mxu0 0.0
        %687 = vmatpush1.msra.mxu0 %v267
        %688 = vmatprep.subr.mxu0 0.0
        %689 = vmatpush1.msra.mxu0 %v266
        %690 = vmatprep.subr.mxu0 0.0
        %691 = vmatpush1.msra.mxu0 %v265
        %692 = vmatprep.subr.mxu0 0.0
        %693 = vmatpush2.msra.mxu0 0.0
        %694 = vmatprep.subr.mxu0 0.0
        %695 = vmatpush2.msra.mxu0 0.0
        %696 = vmatprep.subr.mxu0 0.0
        %697 = vmatpush2.msra.mxu0 0.0
        %698 = vmatprep.subr.mxu0 0.0
        %699 = vmatpush2.msra.mxu0 0.0
        %700 = vmatprep.subr.mxu0 0.0
        %701 = vmatpush2.msra.mxu0 0.0
        %702 = vmatprep.subr.mxu0 0.0
        %703 = vmatpush2.msra.mxu0 0.0
        %704 = vmatprep.subr.mxu0 0.0
        %705 = vmatpush2.msra.mxu0 0.0
        %706 = vmatprep.subr.mxu0 0.0
        %707 = vmatpush2.msra.mxu0 0.0
        %708 = vmatprep.subr.mxu0 0.0
        %709 = vmatpush2.msra.mxu0 0.0
        %710 = vmatprep.subr.mxu0 0.0
        %711 = vmatpush2.msra.mxu0 0.0
        %712 = vmatprep.subr.mxu0 0.0
        %713 = vmatpush2.msra.mxu0 0.0
        %714 = vmatprep.subr.mxu0 0.0
        %715 = vmatpush2.msra.mxu0 0.0
        %716 = vmatprep.subr.mxu0 0.0
        %717 = vmatpush2.msra.mxu0 0.0
        %718 = vmatprep.subr.mxu0 0.0
        %719 = vmatpush2.msra.mxu0 0.0
        %720 = vmatprep.subr.mxu0 0.0
        %721 = vmatpush2.msra.mxu0 0.0
        %722 = vmatprep.subr.mxu0 0.0
        %723 = vmatpush2.msra.mxu0 0.0
        %724 = vmatprep.mubr.f32.mxu0 0.0
        %725 = vmatmul.mubr.f32.gmra.mxu0 %v655
        %v726 = vpop.f32.mrf.mxu0
        %v727 = vadd.f32 0.0, %v726
        %v728 = vpop.f32.mrf.mxu0
        %729 = vmatprep.mubr.f32.mxu0 0.0
        %730 = vmatmul.mubr.f32.gmra.mxu0 %v658
        %v731 = vpop.f32.mrf.mxu0
        %v732 = vadd.f32 0.0, %v731
        %v733 = vpop.f32.mrf.mxu0
        %734 = vdwg.mxu0
        %v735 = vld [vmem:[%s398] sm:$0xf]
        %v736 = vld [vmem:[%s398 + $0x4] sm:$0xf]
        %v737 = vunpack.c.l.bf16 %v735
        %v738 = vunpack.c.l.bf16 %v736
        %v739 = vadd.f32 %v737, %v727
        %v740 = vadd.f32 %v738, %v732
        %741 = vmatprep.subr.mxu0 0.0
        %742 = vmatpush1.msra.mxu0 0.0
        %743 = vmatprep.subr.mxu0 0.0
        %744 = vmatpush1.msra.mxu0 0.0
        %745 = vmatprep.subr.mxu0 0.0
        %746 = vmatpush1.msra.mxu0 0.0
        %747 = vmatprep.subr.mxu0 0.0
        %748 = vmatpush1.msra.mxu0 0.0
        %749 = vmatprep.subr.mxu0 0.0
        %750 = vmatpush1.msra.mxu0 0.0
        %751 = vmatprep.subr.mxu0 0.0
        %752 = vmatpush1.msra.mxu0 0.0
        %753 = vmatprep.subr.mxu0 0.0
        %754 = vmatpush1.msra.mxu0 0.0
        %755 = vmatprep.subr.mxu0 0.0
        %756 = vmatpush1.msra.mxu0 0.0
        %757 = vmatprep.subr.mxu0 0.0
        %758 = vmatpush1.msra.mxu0 0.0
        %759 = vmatprep.subr.mxu0 0.0
        %760 = vmatpush1.msra.mxu0 0.0
        %761 = vmatprep.subr.mxu0 0.0
        %762 = vmatpush1.msra.mxu0 0.0
        %763 = vmatprep.subr.mxu0 0.0
        %764 = vmatpush1.msra.mxu0 0.0
        %765 = vmatprep.subr.mxu0 0.0
        %766 = vmatpush1.msra.mxu0 0.0
        %767 = vmatprep.subr.mxu0 0.0
        %768 = vmatpush1.msra.mxu0 0.0
        %769 = vmatprep.subr.mxu0 0.0
        %770 = vmatpush1.msra.mxu0 %v740
        %771 = vmatprep.subr.mxu0 0.0
        %772 = vmatpush1.msra.mxu0 %v739
        %773 = vmatprep.subr.mxu0 0.0
        %774 = vmatpush2.msra.mxu0 0.0
        %775 = vmatprep.subr.mxu0 0.0
        %776 = vmatpush2.msra.mxu0 0.0
        %777 = vmatprep.subr.mxu0 0.0
        %778 = vmatpush2.msra.mxu0 0.0
        %779 = vmatprep.subr.mxu0 0.0
        %780 = vmatpush2.msra.mxu0 0.0
        %781 = vmatprep.subr.mxu0 0.0
        %782 = vmatpush2.msra.mxu0 0.0
        %783 = vmatprep.subr.mxu0 0.0
        %784 = vmatpush2.msra.mxu0 0.0
        %785 = vmatprep.subr.mxu0 0.0
        %786 = vmatpush2.msra.mxu0 0.0
        %787 = vmatprep.subr.mxu0 0.0
        %788 = vmatpush2.msra.mxu0 0.0
        %789 = vmatprep.subr.mxu0 0.0
        %790 = vmatpush2.msra.mxu0 0.0
        %791 = vmatprep.subr.mxu0 0.0
        %792 = vmatpush2.msra.mxu0 0.0
        %793 = vmatprep.subr.mxu0 0.0
        %794 = vmatpush2.msra.mxu0 0.0
        %795 = vmatprep.subr.mxu0 0.0
        %796 = vmatpush2.msra.mxu0 0.0
        %797 = vmatprep.subr.mxu0 0.0
        %798 = vmatpush2.msra.mxu0 0.0
        %799 = vmatprep.subr.mxu0 0.0
        %800 = vmatpush2.msra.mxu0 0.0
        %801 = vmatprep.subr.mxu0 0.0
        %802 = vmatpush2.msra.mxu0 0.0
        %803 = vmatprep.subr.mxu0 0.0
        %804 = vmatpush2.msra.mxu0 0.0
        %805 = vmatprep.mubr.f32.mxu0 0.0
        %806 = vmatmul.mubr.f32.gmra.mxu0 %v546
        %v807 = vpop.f32.mrf.mxu0
        %v808 = vadd.f32 %v284, %v807
        %v809 = vpop.f32.mrf.mxu0
        %810 = vmatprep.mubr.f32.mxu0 0.0
        %811 = vmatmul.mubr.f32.gmra.mxu0 %v549
        %v812 = vpop.f32.mrf.mxu0
        %v813 = vadd.f32 %v289, %v812
        %v814 = vpop.f32.mrf.mxu0
        %815 = vmatprep.mubr.f32.mxu0 0.0
        %816 = vmatmul.mubr.f32.gmra.mxu0 %v552
        %v817 = vpop.f32.mrf.mxu0
        %v818 = vadd.f32 %v294, %v817
        %v819 = vpop.f32.mrf.mxu0
        %820 = vmatprep.mubr.f32.mxu0 0.0
        %821 = vmatmul.mubr.f32.gmra.mxu0 %v555
        %v822 = vpop.f32.mrf.mxu0
        %v823 = vadd.f32 %v299, %v822
        %v824 = vpop.f32.mrf.mxu0
        %825 = vdwg.mxu0
        %v826 = vmax.f32 %v808, 0.0
        %v827 = vmax.f32 %v813, 0.0
        %v828 = vmax.f32 %v818, 0.0
        %v829 = vmax.f32 %v823, 0.0
        %s830 = scalar_lea.vmem %s239, 32 [#allocation2]
        %831 = vst [vmem:[%s830] sm:$0xff] %v826
        %832 = vst [vmem:[%s830 + $0x8] sm:$0xff] %v827
        %833 = vst [vmem:[%s830 + $0x10] sm:$0xff] %v828
        %834 = vst [vmem:[%s830 + $0x18] sm:$0xff] %v829
        %s835 = sand.u32 %s153, 1
        %s836 = scalar_lea.sflag [#allocation3], %s835
        %s837 = sand.u32 %s153, 1
        %s838 = smul.addr %s837, 64
        %s839 = scalar_lea.vmem [#allocation2], %s838
        // Predicated region
        $region41: #{tpu_custom_call.1} parent=39 // pred_check
          %p840 = pneg %p163
        $region42: #{tpu_custom_call.1} parent=39 // pred_check_branch
          %842 = sbr.rel (%p840) target = $region44
        $region43: #{tpu_custom_call.1} parent=39 // pred_region
          %s844 = ssub.s32 1024, 1024
          %845 = vsyncadd %s836, %s844
          %s846 = smul.addr %s23, 8
          %s847 = sadd.s32 %s24, %s846
          %s848 = smul.addr %s847, 128
          %s849 = scalar_lea.hbm %s5, %s848
          %s850 = sshll.u32 %s839, 4
          %s851 = int_to_ptr.vmem [resolvable:$true] %s850
          %856 = dma.vmem_to_hbm [thread:$0]  %s851, 1024, %s849, %s836, 128, 128, 8
        $region44: #{tpu_custom_call.1} parent=39 // pred_fallthru
          _
      $region40: #{tpu_custom_call.1} parent=5 // pred_fallthru
        _
      %p857 = scmp.le.s32.totalorder 2, %s14
      // Predicated region
      $region45: #{tpu_custom_call.1} parent=5 // pred_check
        %p858 = pneg %p857
      $region46: #{tpu_custom_call.1} parent=5 // pred_check_branch
        %860 = sbr.rel (%p858) target = $region48
      $region47: #{tpu_custom_call.1} parent=5 // pred_region
        %s861 = ssub.s32 %s14, 2
        // Predicated region
        $region49: #{tpu_custom_call.1} parent=47 // pred_check
          %p862 = pneg %p169
        $region50: #{tpu_custom_call.1} parent=47 // pred_check_branch
          %864 = sbr.rel (%p862) target = $region52
        $region51: #{tpu_custom_call.1} parent=47 // pred_region
          %s865 = sand.u32 %s154, 1
          %s866 = scalar_lea.sflag [#allocation3], %s865
          %s867 = sand.u32 %s154, 1
          %s868 = smul.addr %s867, 64
          %s869 = scalar_lea.vmem [#allocation2], %s868
          %870 = dma.done %s866, 1024
        $region52: #{tpu_custom_call.1} parent=47 // pred_fallthru
          _
      $region48: #{tpu_custom_call.1} parent=5 // pred_fallthru
        _
    $region6: #{tpu_custom_call.1} parent=1 // loop_footer
      %s18 = sadd.s32 1, %s14
    $region7: #{tpu_custom_call.1} parent=1 // loop_footer_branch
      %13 = sbr.rel target = $region3
    $region8: #{tpu_custom_call.1} parent=1 // loop_exit
      _
    %871 = vsyncpa [#allocation3], 1
    %s872 = scalar_lea.sflag [#allocation3], 1
    %873 = vsyncpa %s872, 1

</llo_original>
